<compile_context>
chip_gen: v5e
topology: v5e:2x2
jax: 0.10.0
libtpu: 0.0.40
codegen_flags: <defaults>
</compile_context>

<pallas_src>
import jax
import jax.numpy as jnp
from jax.experimental import pallas as pl
from jax.experimental.pallas import tpu as pltpu


def _dma_copy_kernel(x_hbm_ref, o_hbm_ref, copy_sem):
    # Straight HBM -> HBM DMA of the whole (already squeezed-shape) array.
    # No VMEM bounce, no vreg traffic, no lane-masking concerns.
    cp = pltpu.make_async_copy(x_hbm_ref, o_hbm_ref, copy_sem)
    cp.start()
    cp.wait()


def pallas_squeeze(x):
    """torch.Tensor.squeeze(): drop every size-1 dimension."""
    in_shape = tuple(x.shape)
    out_shape = tuple(d for d in in_shape if d != 1)

    if out_shape == in_shape:
        # Nothing to squeeze: torch returns a view; return the array as-is.
        return x
    if x.size == 0:
        # Degenerate empty tensor: pure metadata change.
        return jnp.reshape(x, out_shape)

    # Present the kernel with a rank >= 2 shape.  For result rank >= 2 the
    # minor dims are kept verbatim, so this reshape is a metadata-only
    # row-major collapse of the unit dims (no data movement before the DMA).
    if len(out_shape) >= 2:
        kshape = out_shape
    elif len(out_shape) == 1:
        kshape = (1, out_shape[0])
    else:  # every dim was size 1 -> scalar result
        kshape = (1, 1)

    x_k = jnp.reshape(x, kshape)
    nbytes = x.size * x.dtype.itemsize

    y_k = pl.pallas_call(
        _dma_copy_kernel,
        out_shape=jax.ShapeDtypeStruct(kshape, x.dtype),
        in_specs=[pl.BlockSpec(memory_space=pl.ANY)],
        out_specs=pl.BlockSpec(memory_space=pl.ANY),
        scratch_shapes=[pltpu.SemaphoreType.DMA],
        cost_estimate=pl.CostEstimate(
            flops=0, transcendentals=0, bytes_accessed=2 * nbytes),
    )(x_k)

    # TODO(synk): with a donated input, input_output_aliases={0: 0} would make
    # this zero-copy (squeeze is a view in torch); left off so callers need no
    # donation contract.
    return jnp.reshape(y_k, out_shape)


if __name__ == "__main__":
    key = jax.random.PRNGKey(0)
    k1, k2, k3 = jax.random.split(key, 3)

    squeeze_jit = jax.jit(pallas_squeeze)
    ok = True

    # Main path: [2, 1, 4, 1, 16, 16] -> [2, 4, 16, 16]
    x = jax.random.normal(k1, (2, 1, 4, 1, 16, 16), jnp.float32)
    y = jax.block_until_ready(squeeze_jit(x))
    ref = jnp.squeeze(x)
    ok &= (y.shape == ref.shape) and bool(jnp.array_equal(y, ref))

    # Trailing unit (lane) dim squeezed: [1, 8, 32, 1] -> [8, 32]
    x2 = jax.random.normal(k2, (1, 8, 32, 1), jnp.float32)
    y2 = jax.block_until_ready(squeeze_jit(x2))
    ref2 = jnp.squeeze(x2)
    ok &= (y2.shape == ref2.shape) and bool(jnp.array_equal(y2, ref2))

    # Rank-1 result: [1, 8, 1] -> [8]
    x3 = jax.random.normal(k3, (1, 8, 1), jnp.float32)
    y3 = jax.block_until_ready(squeeze_jit(x3))
    ref3 = jnp.squeeze(x3)
    ok &= (y3.shape == ref3.shape) and bool(jnp.array_equal(y3, ref3))

    if ok:
        print("KERNEL_OK")
    else:
        raise SystemExit("mismatch vs jnp.squeeze reference")
</pallas_src>

<mosaic_0001>
module attributes {stable_mosaic.version = 11 : i64} {
  func.func @_dma_copy_kernel(%arg0: memref<2x4x16x16xf32, #tpu.memory_space<any>>, %arg1: memref<2x4x16x16xf32, #tpu.memory_space<any>>, %arg2: memref<!tpu.dma_semaphore, #tpu.memory_space<semaphore_mem>>) attributes {dimension_semantics = [], scalar_prefetch = 0 : i64, scratch_operands = 1 : i64, tpu.core_type = #tpu.core_type<tc>} {
    tpu.enqueue_dma source(%arg0 : memref<2x4x16x16xf32, #tpu.memory_space<any>>) target(%arg1 : memref<2x4x16x16xf32, #tpu.memory_space<any>>) target_semaphore(%arg2 : memref<!tpu.dma_semaphore, #tpu.memory_space<semaphore_mem>>)
    tpu.wait_dma2 semaphore(%arg2 : memref<!tpu.dma_semaphore, #tpu.memory_space<semaphore_mem>>) src(%arg0 : memref<2x4x16x16xf32, #tpu.memory_space<any>>) dst(%arg1 : memref<2x4x16x16xf32, #tpu.memory_space<any>>)
    return
  }
}

</mosaic_0001>

<llo_original>
// kernel: pallas_squeeze.1
$region0: #{pallas_squeeze.1}
  #allocation0 [shape = 'u32[]', space=smem, size = 0x4, offset = 0x4, fixed_abs, tag = 'smem constant byte address 0x4 - core index']
  #allocation1 [shape = 'u32[72,128]{1,0:T(1,128)}', space=vmem, size = 0x9000, scoped, tag = 'internal scratch']
  #allocation2 [shape = 's32[1]{0}', space=sflag, size = 0x4, scoped, tag = 'scratch operand']
  #allocation3 [shape = 's32[]', space=sflag, size = 0x4, offset = 0, fixed_abs, tag = 'sflag constant byte address 0x0 - dummy sync flag']
  #allocation4 [shape = 'u32[0]{0}', space=smem, size = 0, offset = 0, fixed_abs, tag = 'smem constant byte address 0x0 - null']
  %s0 = inlined_call_operand.hbm [shape: f32[2,4,16,16], index: 0, kind: input, shape index: {}]
  %s1 = inlined_call_operand.hbm [shape: f32[2,4,16,16], index: 1, kind: output, shape index: {}]
  %s2 = sld [smem:[#allocation0]]
  $region2: #{pallas_squeeze.1} parent=0
    _
  %s4 = ssub.s32 1, %s2
  %s5 = scalar_select 0, %s4, %s2
  %s7 = sshll.u32 1, 14
  %s8 = sxor.u32 4294967295, %s7
  %s10 = sshll.u32 %s0, 4
  %s11 = int_to_ptr.hbm [resolvable:$true] %s10
  %s12 = sshll.u32 %s1, 4
  %s13 = int_to_ptr.hbm [resolvable:$true] %s12
  %16 = dma.general %s11, 2048, %s13, [#allocation2], [#allocation3], [#allocation4], 0, 0
  %s17 = smul.u32 2, 4
  %s18 = smul.u32 %s17, 16
  %s19 = smul.u32 %s18, 1
  %s20 = sshll.u32 %s19, 4
  %21 = dma.done [#allocation2], %s20
  %22 = vsyncmov [#allocation2]
  %s23 = vpop.sfrf %22
  %p24 = scmp.eq.s32.totalorder %s23, 0
  %p25 = pneg %p24
  %27 = shalt.err (%p25)

</llo_original>
